<compile_context>
chip_gen: v7x
topology: tpu7x:2x2x1
jax: 0.10.0
libtpu: 0.0.40
codegen_flags: <defaults>
</compile_context>

<pallas_src>
import functools

import jax
import jax.numpy as jnp
from jax import lax
from jax.experimental import pallas as pl
from jax.experimental.pallas import tpu as pltpu

_CHUNK = 128  # lane-width sub-chunk; keep 128 (256 would blow the vreg file)


def _ca_kernel(x_ref, w1t_ref, b1_ref, w2t_ref, b2_ref, o_ref, *, chunk,
               use_bf16):
    # x_ref:  (C_in, tn)      w1t_ref: (H1p, C_in)   b1_ref: (H1p, 1)
    # w2t_ref:(C_out, H1p)    b2_ref:  (C_out, 1)    o_ref:  (C_out, tn)
    cdt = jnp.bfloat16 if use_bf16 else jnp.float32

    # Weights are loaded / cast once per grid step and stay resident across the
    # chunk loop.  (TODO(synk): on v7x, pinning w1t/w2t via matmul_push_rhs /
    # matmul_acc_lhs would also keep them resident inside the MXUs.)
    w1t = w1t_ref[...].astype(cdt)          # (H1p, C_in)
    w2t = w2t_ref[...].astype(cdt)          # (C_out, H1p)
    b1 = b1_ref[...]                        # (H1p, 1), f32
    b2 = b2_ref[...]                        # (C_out, 1), f32

    tn = x_ref.shape[-1]
    assert tn % chunk == 0, f"tile width {tn} must be a multiple of {chunk}"
    n_chunks = tn // chunk

    def body(c, carry):
        s = pl.multiple_of(c * chunk, chunk)
        xc = x_ref[:, pl.ds(s, chunk)].astype(cdt)                  # (C_in, chunk)
        h = jnp.dot(w1t, xc, preferred_element_type=jnp.float32)    # (H1p, chunk)
        h = jnp.maximum(h + b1, 0.0).astype(cdt)                    # bias + ReLU
        y = jnp.dot(w2t, h, preferred_element_type=jnp.float32) + b2
        o_ref[:, pl.ds(s, chunk)] = y.astype(o_ref.dtype)
        return carry

    # Bounded unroll: gives the scheduler cross-iteration MXU overlap without
    # keeping many (H1p, chunk) f32 hidden tiles (32 vregs each) live at once.
    lax.fori_loop(0, n_chunks, body, 0, unroll=2)


def ca_model_forward(x_nchw, w1, b1, w2, b2, *, tn=32768, chunk=_CHUNK,
                     use_bf16=True):
    """x_nchw: (N, env_d*3, H, W).  w1: (C_in, 232), b1: (232,),
    w2: (232, env_d), b2: (env_d,).  Returns (N, env_d, H, W) float32."""
    N, C_in, H, W = x_nchw.shape
    H1 = w1.shape[1]
    C_out = w2.shape[1]
    S = H * W

    # Zero-pad hidden dim 232 -> 256: padded rows give relu(0*x + 0) = 0 and
    # the padded (zero) columns of W2^T ignore them -> result unchanged, but
    # all vregs / MXU passes are full-width.  Weights are ~16 KiB: negligible.
    H1p = pl.cdiv(H1, 128) * 128
    w1t = jnp.zeros((H1p, C_in), w1.dtype).at[:H1, :].set(w1.T)
    b1p = jnp.zeros((H1p, 1), b1.dtype).at[:H1, 0].set(b1)
    w2t = jnp.zeros((C_out, H1p), w2.dtype).at[:, :H1].set(w2.T)
    b2c = b2.reshape(C_out, 1)

    # NCHW is already (batch, channel-rows, spatial-lanes): reshape only.
    x3 = x_nchw.reshape(N, C_in, S)

    # --- spatial tile size selection ---------------------------------------
    s_ceil = pl.cdiv(S, chunk) * chunk

    # Generation-aware VMEM budget: double-buffered in+out tiles cost
    # 2 * (C_in + C_out) * 4 bytes per lane of tn (weights add ~0.3 MiB).
    try:
        vmem_phys = int(pltpu.get_tpu_info().vmem_capacity_bytes)
    except Exception:
        vmem_phys = 64 << 20  # conservative (v7x-sized) fallback
    vmem_budget = min(vmem_phys // 2, 24 << 20)
    bytes_per_lane = 2 * (C_in + C_out) * 4
    tn_cap = max(chunk, (vmem_budget // bytes_per_lane) // chunk * chunk)

    tn = max(chunk, min(tn, s_ceil, tn_cap))
    tn = (tn // chunk) * chunk

    # Megacore (v7x has 2 TCs): never collapse the grid to a single step.
    if N == 1 and pl.cdiv(S, tn) < 2 and s_ceil >= 2 * chunk:
        tn = pl.cdiv(pl.cdiv(s_ceil, 2), chunk) * chunk

    assert tn % chunk == 0 and tn >= chunk
    grid = (N, pl.cdiv(S, tn))

    # Explicit scoped-VMEM limit so large tiles also fit v5e's 16 MiB default.
    footprint = bytes_per_lane * tn + (2 << 20)
    vmem_limit = int(max(footprint, min(vmem_phys - (8 << 20), 32 << 20)))

    out3 = pl.pallas_call(
        functools.partial(_ca_kernel, chunk=chunk, use_bf16=use_bf16),
        out_shape=jax.ShapeDtypeStruct((N, C_out, S), x_nchw.dtype),
        grid_spec=pltpu.PrefetchScalarGridSpec(
            num_scalar_prefetch=0,
            grid=grid,
            in_specs=[
                pl.BlockSpec((None, C_in, tn), lambda n, j: (n, 0, j)),
                pl.BlockSpec((H1p, C_in), lambda n, j: (0, 0)),
                pl.BlockSpec((H1p, 1), lambda n, j: (0, 0)),
                pl.BlockSpec((C_out, H1p), lambda n, j: (0, 0)),
                pl.BlockSpec((C_out, 1), lambda n, j: (0, 0)),
            ],
            out_specs=pl.BlockSpec((None, C_out, tn), lambda n, j: (n, 0, j)),
        ),
        compiler_params=pltpu.CompilerParams(
            dimension_semantics=("parallel", "parallel"),
            vmem_limit_bytes=vmem_limit),
    )(x3, w1t, b1p, w2t, b2c)

    return out3.reshape(N, C_out, H, W)


def make_params(env_d, key):
    """Deterministic parameter init matching the PyTorch module's shapes.

    conv1: weight (232, env_d*3, 1, 1) stored as (env_d*3, 232); bias (232,).
    conv2: zero-initialized (as in the PyTorch __init__).
    """
    C_in = env_d * 3
    H1 = 232
    k1, k2 = jax.random.split(key)
    bound = 1.0 / jnp.sqrt(float(C_in))
    w1 = jax.random.uniform(k1, (C_in, H1), jnp.float32, -bound, bound)
    b1 = jax.random.uniform(k2, (H1,), jnp.float32, -bound, bound)
    w2 = jnp.zeros((H1, env_d), jnp.float32)   # nn.init.zeros_
    b2 = jnp.zeros((env_d,), jnp.float32)      # nn.init.zeros_
    return w1, b1, w2, b2


if __name__ == "__main__":
    env_d = 4
    N, H, W = 2, 16, 16
    C_in = env_d * 3

    key = jax.random.PRNGKey(0)
    kx, kp, kw2, kb2 = jax.random.split(key, 4)
    x = jax.random.normal(kx, (N, C_in, H, W), jnp.float32)
    w1, b1, w2, b2 = make_params(env_d, kp)

    # 1) As-initialized module: conv2 is zero-init -> output must be exactly 0.
    out = jax.block_until_ready(ca_model_forward(x, w1, b1, w2, b2))
    assert out.shape == (N, env_d, H, W)
    assert float(jnp.max(jnp.abs(out))) <= 1e-6, "zero-init conv2 should give 0"

    # Plain-JAX reference (1x1 convs == per-pixel matmuls), high precision.
    w2r = 0.1 * jax.random.normal(kw2, (232, env_d), jnp.float32)
    b2r = 0.1 * jax.random.normal(kb2, (env_d,), jnp.float32)
    with jax.default_matmul_precision("highest"):
        x_flat = jnp.transpose(x, (0, 2, 3, 1)).reshape(-1, C_in)
        ref = jnp.maximum(x_flat @ w1 + b1, 0.0) @ w2r + b2r
    ref = jnp.transpose(ref.reshape(N, H, W, env_d), (0, 3, 1, 2))

    # 2) f32 (bit-parity-ish) path.
    out_f32 = jax.block_until_ready(
        ca_model_forward(x, w1, b1, w2r, b2r, use_bf16=False))
    assert out_f32.shape == (N, env_d, H, W)
    diff_f32 = float(jnp.max(jnp.abs(out_f32 - ref)))
    assert jnp.allclose(out_f32, ref, atol=2e-2, rtol=1e-2), (
        f"f32 path mismatch vs reference: max abs diff = {diff_f32}")

    # 3) Default bf16-MXU path (f32 accumulation); slightly looser tolerance.
    out_bf16 = jax.block_until_ready(
        ca_model_forward(x, w1, b1, w2r, b2r, use_bf16=True))
    diff_bf16 = float(jnp.max(jnp.abs(out_bf16 - ref)))
    assert jnp.allclose(out_bf16, ref, atol=3e-2, rtol=2e-2), (
        f"bf16 path mismatch vs reference: max abs diff = {diff_bf16}")

    print("KERNEL_OK")
</pallas_src>

<mosaic_0001>
module attributes {stable_mosaic.version = 11 : i64} {
  func.func @_ca_kernel(%arg0: i32, %arg1: i32, %arg2: memref<1x12x256xf32, #tpu.memory_space<vmem>>, %arg3: memref<256x12xf32, #tpu.memory_space<vmem>>, %arg4: memref<256x1xf32, #tpu.memory_space<vmem>>, %arg5: memref<4x256xf32, #tpu.memory_space<vmem>>, %arg6: memref<4x1xf32, #tpu.memory_space<vmem>>, %arg7: memref<1x4x256xf32, #tpu.memory_space<vmem>>) attributes {dimension_semantics = [#tpu.dimension_semantics<parallel>, #tpu.dimension_semantics<parallel>], iteration_bounds = array<i64: 2, 1>, scalar_prefetch = 0 : i64, scratch_operands = 0 : i64, tpu.core_type = #tpu.core_type<tc>, window_params = [{transform_indices = @transform_0, window_bounds = array<i64: 1, 12, 256>}, {pipeline_mode = #tpu.pipeline_mode<synchronous>, transform_indices = @transform_1, window_bounds = array<i64: 256, 12>}, {pipeline_mode = #tpu.pipeline_mode<synchronous>, transform_indices = @transform_2, window_bounds = array<i64: 256, 1>}, {pipeline_mode = #tpu.pipeline_mode<synchronous>, transform_indices = @transform_3, window_bounds = array<i64: 4, 256>}, {pipeline_mode = #tpu.pipeline_mode<synchronous>, transform_indices = @transform_4, window_bounds = array<i64: 4, 1>}, {transform_indices = @transform_5, window_bounds = array<i64: 1, 4, 256>}]} {
    %c0 = arith.constant 0 : index
    %c0_0 = arith.constant 0 : index
    %0 = vector.load %arg3[%c0, %c0_0] : memref<256x12xf32, #tpu.memory_space<vmem>>, vector<256x12xf32>
    %1 = arith.truncf %0 : vector<256x12xf32> to vector<256x12xbf16>
    %c0_1 = arith.constant 0 : index
    %c0_2 = arith.constant 0 : index
    %2 = vector.load %arg5[%c0_1, %c0_2] : memref<4x256xf32, #tpu.memory_space<vmem>>, vector<4x256xf32>
    %3 = arith.truncf %2 : vector<4x256xf32> to vector<4x256xbf16>
    %c0_3 = arith.constant 0 : index
    %c0_4 = arith.constant 0 : index
    %4 = vector.load %arg4[%c0_3, %c0_4] : memref<256x1xf32, #tpu.memory_space<vmem>>, vector<256x1xf32>
    %c0_5 = arith.constant 0 : index
    %c0_6 = arith.constant 0 : index
    %5 = vector.load %arg6[%c0_5, %c0_6] : memref<4x1xf32, #tpu.memory_space<vmem>>, vector<4x1xf32>
    %c0_i32 = arith.constant 0 : i32
    %c128_i32 = arith.constant 128 : i32
    %6 = arith.muli %c0_i32, %c128_i32 : i32
    %7 = tpu.assume_multiple %6, 128 : i32
    %c0_7 = arith.constant 0 : index
    %c0_8 = arith.constant 0 : index
    %8 = arith.index_cast %7 : i32 to index
    %9 = vector.load %arg2[%c0_7, %c0_8, %8] : memref<1x12x256xf32, #tpu.memory_space<vmem>>, vector<1x12x128xf32>
    %10 = vector.shape_cast %9 : vector<1x12x128xf32> to vector<12x128xf32>
    %11 = arith.truncf %10 : vector<12x128xf32> to vector<12x128xbf16>
    %cst = arith.constant dense<0.000000e+00> : vector<256x128xf32>
    %12 = tpu.matmul %1, %11, %cst {dimension_numbers = #tpu.dot_dimension_numbers<[1], [0], [0], [1], [0, 0, 1, 1], [], []>} : vector<256x12xbf16>, vector<12x128xbf16>, vector<256x128xf32> -> vector<256x128xf32>
    %13 = vector.broadcast %4 : vector<256x1xf32> to vector<256x128xf32>
    %14 = arith.addf %12, %13 : vector<256x128xf32>
    %cst_9 = arith.constant 0.000000e+00 : f32
    %15 = vector.broadcast %cst_9 : f32 to vector<256x128xf32>
    %16 = arith.maximumf %14, %15 : vector<256x128xf32>
    %17 = arith.truncf %16 : vector<256x128xf32> to vector<256x128xbf16>
    %cst_10 = arith.constant dense<0.000000e+00> : vector<4x128xf32>
    %18 = tpu.matmul %3, %17, %cst_10 {dimension_numbers = #tpu.dot_dimension_numbers<[1], [0], [0], [1], [0, 0, 1, 1], [], []>} : vector<4x256xbf16>, vector<256x128xbf16>, vector<4x128xf32> -> vector<4x128xf32>
    %19 = vector.broadcast %5 : vector<4x1xf32> to vector<4x128xf32>
    %20 = arith.addf %18, %19 : vector<4x128xf32>
    %c0_11 = arith.constant 0 : index
    %c0_12 = arith.constant 0 : index
    %21 = arith.index_cast %7 : i32 to index
    %22 = vector.load %arg7[%c0_11, %c0_12, %21] : memref<1x4x256xf32, #tpu.memory_space<vmem>>, vector<1x4x128xf32>
    %23 = vector.shape_cast %22 : vector<1x4x128xf32> to vector<4x128xf32>
    %24 = vector.shape_cast %20 : vector<4x128xf32> to vector<1x4x128xf32>
    tpu.vector_store %arg7[%c0_11, %c0_12, %21], %24 {strides = array<i32>} : memref<1x4x256xf32, #tpu.memory_space<vmem>>, vector<1x4x128xf32>,
    %c1_i32 = arith.constant 1 : i32
    %c128_i32_13 = arith.constant 128 : i32
    %25 = arith.muli %c1_i32, %c128_i32_13 : i32
    %26 = tpu.assume_multiple %25, 128 : i32
    %c0_14 = arith.constant 0 : index
    %c0_15 = arith.constant 0 : index
    %27 = arith.index_cast %26 : i32 to index
    %28 = vector.load %arg2[%c0_14, %c0_15, %27] : memref<1x12x256xf32, #tpu.memory_space<vmem>>, vector<1x12x128xf32>
    %29 = vector.shape_cast %28 : vector<1x12x128xf32> to vector<12x128xf32>
    %30 = arith.truncf %29 : vector<12x128xf32> to vector<12x128xbf16>
    %cst_16 = arith.constant dense<0.000000e+00> : vector<256x128xf32>
    %31 = tpu.matmul %1, %30, %cst_16 {dimension_numbers = #tpu.dot_dimension_numbers<[1], [0], [0], [1], [0, 0, 1, 1], [], []>} : vector<256x12xbf16>, vector<12x128xbf16>, vector<256x128xf32> -> vector<256x128xf32>
    %32 = vector.broadcast %4 : vector<256x1xf32> to vector<256x128xf32>
    %33 = arith.addf %31, %32 : vector<256x128xf32>
    %cst_17 = arith.constant 0.000000e+00 : f32
    %34 = vector.broadcast %cst_17 : f32 to vector<256x128xf32>
    %35 = arith.maximumf %33, %34 : vector<256x128xf32>
    %36 = arith.truncf %35 : vector<256x128xf32> to vector<256x128xbf16>
    %cst_18 = arith.constant dense<0.000000e+00> : vector<4x128xf32>
    %37 = tpu.matmul %3, %36, %cst_18 {dimension_numbers = #tpu.dot_dimension_numbers<[1], [0], [0], [1], [0, 0, 1, 1], [], []>} : vector<4x256xbf16>, vector<256x128xbf16>, vector<4x128xf32> -> vector<4x128xf32>
    %38 = vector.broadcast %5 : vector<4x1xf32> to vector<4x128xf32>
    %39 = arith.addf %37, %38 : vector<4x128xf32>
    %c0_19 = arith.constant 0 : index
    %c0_20 = arith.constant 0 : index
    %40 = arith.index_cast %26 : i32 to index
    %41 = vector.load %arg7[%c0_19, %c0_20, %40] : memref<1x4x256xf32, #tpu.memory_space<vmem>>, vector<1x4x128xf32>
    %42 = vector.shape_cast %41 : vector<1x4x128xf32> to vector<4x128xf32>
    %43 = vector.shape_cast %39 : vector<4x128xf32> to vector<1x4x128xf32>
    tpu.vector_store %arg7[%c0_19, %c0_20, %40], %43 {strides = array<i32>} : memref<1x4x256xf32, #tpu.memory_space<vmem>>, vector<1x4x128xf32>,
    %c2_i32 = arith.constant 2 : i32
    return
  }
  func.func @transform_0(%arg0: i32, %arg1: i32) -> (i32, i32, i32) {
    %c0_i32 = arith.constant 0 : i32
    %c0_i32_0 = arith.constant 0 : i32
    return %arg0, %c0_i32, %arg1 : i32, i32, i32
  }
  func.func @transform_1(%arg0: i32, %arg1: i32) -> (i32, i32) {
    %c0_i32 = arith.constant 0 : i32
    %c0_i32_0 = arith.constant 0 : i32
    %c0_i32_1 = arith.constant 0 : i32
    return %c0_i32, %c0_i32_0 : i32, i32
  }
  func.func @transform_2(%arg0: i32, %arg1: i32) -> (i32, i32) {
    %c0_i32 = arith.constant 0 : i32
    %c0_i32_0 = arith.constant 0 : i32
    %c0_i32_1 = arith.constant 0 : i32
    return %c0_i32, %c0_i32_0 : i32, i32
  }
  func.func @transform_3(%arg0: i32, %arg1: i32) -> (i32, i32) {
    %c0_i32 = arith.constant 0 : i32
    %c0_i32_0 = arith.constant 0 : i32
    %c0_i32_1 = arith.constant 0 : i32
    return %c0_i32, %c0_i32_0 : i32, i32
  }
  func.func @transform_4(%arg0: i32, %arg1: i32) -> (i32, i32) {
    %c0_i32 = arith.constant 0 : i32
    %c0_i32_0 = arith.constant 0 : i32
    %c0_i32_1 = arith.constant 0 : i32
    return %c0_i32, %c0_i32_0 : i32, i32
  }
  func.func @transform_5(%arg0: i32, %arg1: i32) -> (i32, i32, i32) {
    %c0_i32 = arith.constant 0 : i32
    %c0_i32_0 = arith.constant 0 : i32
    return %arg0, %c0_i32, %arg1 : i32, i32, i32
  }
}

</mosaic_0001>

<llo_original>
// kernel: tpu_custom_call.1
$region0: #{tpu_custom_call.1}
  #allocation0 [shape = 'u32[]', space=smem, size = 0x4, offset = 0x4, fixed_abs, tag = 'smem constant byte address 0x4 - core index']
  #allocation1 [shape = 'u32[144,128]{1,0:T(1,128)}', space=vmem, size = 0x12000, scoped, tag = 'internal scratch']
  %s0 = inlined_call_operand.vmem [shape: f32[2,12,256], index: 0, kind: input, shape index: {}]
  %s1 = inlined_call_operand.vmem [shape: f32[256,12], index: 1, kind: input, shape index: {}]
  %s2 = inlined_call_operand.vmem [shape: f32[256,1], index: 2, kind: input, shape index: {}]
  %s3 = inlined_call_operand.vmem [shape: f32[4,256], index: 3, kind: input, shape index: {}]
  %s4 = inlined_call_operand.vmem [shape: f32[4,1], index: 4, kind: input, shape index: {}]
  %s5 = inlined_call_operand.hbm [shape: f32[2,4,256], index: 5, kind: output, shape index: {}]
  %s6 = sld [smem:[#allocation0]]
  $region53: #{tpu_custom_call.1} parent=0
    _
  %s8 = ssub.s32 1, %s6
  %s9 = scalar_select 0, %s8, %s6
  $region1: #{tpu_custom_call.1} parent=0
    #allocation2 [shape = 'u8[8192]{0}', space=vmem, size = 0x2000, scoped, tag = 'output window, operand 0']
    #allocation3 [shape = 's32[2]{0}', space=sflag, size = 0x8, scoped, tag = 'scoped memory for tpu_custom_call.1']
    %10 = vsyncpa [#allocation3], 0
    %s11 = scalar_lea.sflag [#allocation3], 1
    %12 = vsyncpa %s11, 0
    loop: start=0, step=1, limit=4
    $region2: #{tpu_custom_call.1} parent=1 // loop_pre_header
      _
    $region3: #{tpu_custom_call.1} parent=1 // loop_header
      %s14 = sphi 0, %s18
      %p15 = scmp.ge.s32.totalorder %s14, 4
      %s21 = sphi 0, %s33
      %s22 = sphi 0, %s29
      %s23 = sphi 0, %s21
      %s24 = sphi 0, %s22
      %s25 = sphi 0, %s23
      %s26 = sphi 0, %s24
      %s38 = sphi 0, %s40
      %s41 = sphi 0, %s38
      %s42 = sphi 0, %s41
      %s58 = sphi 0, %s42
      %s62 = sphi 0, %s62
      %s64 = sphi 0, %s62
      %s65 = sphi 0, %s64
      %s79 = sphi 0, %s65
      %s83 = sphi 0, %s83
      %s85 = sphi 0, %s83
      %s86 = sphi 0, %s85
      %s100 = sphi 0, %s86
      %s104 = sphi 0, %s104
      %s106 = sphi 0, %s104
      %s107 = sphi 0, %s106
      %s121 = sphi 0, %s107
      %s125 = sphi 0, %s125
      %s127 = sphi 0, %s125
      %s128 = sphi 0, %s127
      %s142 = sphi 0, %s128
      %s150 = sphi 0, %s152
      %s153 = sphi 0, %s150
      %s154 = sphi 0, %s153
      %s170 = sphi 0, %s154
    $region4: #{tpu_custom_call.1} parent=1 // loop_header_branch
      %17 = sbr.rel (%p15) target = $region8
    $region5: #{tpu_custom_call.1} parent=1 // loop_body
      %s19 = ssub.s32 %s14, 1
      %s20 = ssub.s32 %s14, 2
      %s27 = sadd.s32 1, %s22
      %p28 = scmp.ge.s32.totalorder %s27, 1
      %s29 = scalar_select %p28, 0, %s27
      %s30 = sadd.s32 1, %s21
      %s31 = scalar_select %p28, %s30, %s21
      %p32 = scmp.ge.s32.totalorder %s31, 2
      %s33 = scalar_select %p32, 0, %s31
      %s34 = ssub.s32 %s21, %s33
      %s35 = ssub.s32 %s22, %s29
      %s36 = sor.u32 %s34, %s35
      %p37 = scmp.eq.s32.totalorder %s36, 0
      %s39 = sadd.s32 %s38, 1
      %s40 = scalar_select %p37, %s38, %s39
      %p43 = pneg %p37
      %p44 = scmp.eq.s32.totalorder %s14, 1
      %p45 = por %p43, %p44
      %p46 = scmp.ne.s32.totalorder %s38, %s41
      %p47 = scmp.eq.s32.totalorder %s14, 0
      %p48 = por %p46, %p47
      %p49 = scmp.ne.s32.totalorder %s38, %s41
      %p50 = scmp.eq.s32.totalorder %s19, 1
      %p51 = por %p49, %p50
      %p52 = scmp.ne.s32.totalorder %s41, %s42
      %p53 = scmp.eq.s32.totalorder %s19, 0
      %p54 = por %p52, %p53
      %p55 = scmp.ne.s32.totalorder %s41, %s42
      %p56 = scmp.eq.s32.totalorder %s20, 1
      %p57 = por %p55, %p56
      %p59 = scmp.ne.s32.totalorder %s42, %s58
      %p60 = scmp.eq.s32.totalorder %s20, 0
      %p61 = por %p59, %p60
      %s63 = sadd.s32 %s62, 1
      %p66 = scmp.eq.s32.totalorder %s14, 1
      %p67 = scmp.ne.s32.totalorder %s62, %s64
      %p68 = scmp.eq.s32.totalorder %s14, 0
      %p69 = por %p67, %p68
      %p70 = scmp.ne.s32.totalorder %s62, %s64
      %p71 = scmp.eq.s32.totalorder %s19, 1
      %p72 = por %p70, %p71
      %p73 = scmp.ne.s32.totalorder %s64, %s65
      %p74 = scmp.eq.s32.totalorder %s19, 0
      %p75 = por %p73, %p74
      %p76 = scmp.ne.s32.totalorder %s64, %s65
      %p77 = scmp.eq.s32.totalorder %s20, 1
      %p78 = por %p76, %p77
      %p80 = scmp.ne.s32.totalorder %s65, %s79
      %p81 = scmp.eq.s32.totalorder %s20, 0
      %p82 = por %p80, %p81
      %s84 = sadd.s32 %s83, 1
      %p87 = scmp.eq.s32.totalorder %s14, 1
      %p88 = scmp.ne.s32.totalorder %s83, %s85
      %p89 = scmp.eq.s32.totalorder %s14, 0
      %p90 = por %p88, %p89
      %p91 = scmp.ne.s32.totalorder %s83, %s85
      %p92 = scmp.eq.s32.totalorder %s19, 1
      %p93 = por %p91, %p92
      %p94 = scmp.ne.s32.totalorder %s85, %s86
      %p95 = scmp.eq.s32.totalorder %s19, 0
      %p96 = por %p94, %p95
      %p97 = scmp.ne.s32.totalorder %s85, %s86
      %p98 = scmp.eq.s32.totalorder %s20, 1
      %p99 = por %p97, %p98
      %p101 = scmp.ne.s32.totalorder %s86, %s100
      %p102 = scmp.eq.s32.totalorder %s20, 0
      %p103 = por %p101, %p102
      %s105 = sadd.s32 %s104, 1
      %p108 = scmp.eq.s32.totalorder %s14, 1
      %p109 = scmp.ne.s32.totalorder %s104, %s106
      %p110 = scmp.eq.s32.totalorder %s14, 0
      %p111 = por %p109, %p110
      %p112 = scmp.ne.s32.totalorder %s104, %s106
      %p113 = scmp.eq.s32.totalorder %s19, 1
      %p114 = por %p112, %p113
      %p115 = scmp.ne.s32.totalorder %s106, %s107
      %p116 = scmp.eq.s32.totalorder %s19, 0
      %p117 = por %p115, %p116
      %p118 = scmp.ne.s32.totalorder %s106, %s107
      %p119 = scmp.eq.s32.totalorder %s20, 1
      %p120 = por %p118, %p119
      %p122 = scmp.ne.s32.totalorder %s107, %s121
      %p123 = scmp.eq.s32.totalorder %s20, 0
      %p124 = por %p122, %p123
      %s126 = sadd.s32 %s125, 1
      %p129 = scmp.eq.s32.totalorder %s14, 1
      %p130 = scmp.ne.s32.totalorder %s125, %s127
      %p131 = scmp.eq.s32.totalorder %s14, 0
      %p132 = por %p130, %p131
      %p133 = scmp.ne.s32.totalorder %s125, %s127
      %p134 = scmp.eq.s32.totalorder %s19, 1
      %p135 = por %p133, %p134
      %p136 = scmp.ne.s32.totalorder %s127, %s128
      %p137 = scmp.eq.s32.totalorder %s19, 0
      %p138 = por %p136, %p137
      %p139 = scmp.ne.s32.totalorder %s127, %s128
      %p140 = scmp.eq.s32.totalorder %s20, 1
      %p141 = por %p139, %p140
      %p143 = scmp.ne.s32.totalorder %s128, %s142
      %p144 = scmp.eq.s32.totalorder %s20, 0
      %p145 = por %p143, %p144
      %s146 = ssub.s32 %s21, %s33
      %s147 = ssub.s32 %s22, %s29
      %s148 = sor.u32 %s146, %s147
      %p149 = scmp.eq.s32.totalorder %s148, 0
      %s151 = sadd.s32 %s150, 1
      %s152 = scalar_select %p149, %s150, %s151
      %p155 = pneg %p149
      %p156 = scmp.eq.s32.totalorder %s14, 1
      %p157 = por %p155, %p156
      %p158 = scmp.ne.s32.totalorder %s150, %s153
      %p159 = scmp.eq.s32.totalorder %s14, 0
      %p160 = por %p158, %p159
      %p161 = scmp.ne.s32.totalorder %s150, %s153
      %p162 = scmp.eq.s32.totalorder %s19, 1
      %p163 = por %p161, %p162
      %p164 = scmp.ne.s32.totalorder %s153, %s154
      %p165 = scmp.eq.s32.totalorder %s19, 0
      %p166 = por %p164, %p165
      %p167 = scmp.ne.s32.totalorder %s153, %s154
      %p168 = scmp.eq.s32.totalorder %s20, 1
      %p169 = por %p167, %p168
      %p171 = scmp.ne.s32.totalorder %s154, %s170
      %p172 = scmp.eq.s32.totalorder %s20, 0
      %p173 = por %p171, %p172
      %p174 = scmp.le.s32.totalorder 1, %s14
      %p175 = scmp.lt.s32.totalorder %s14, 3
      %p176 = pnand %p174, %p175
      %p177 = pneg %p176
      // Predicated region
      $region9: #{tpu_custom_call.1} parent=5 // pred_check
        _
      $region10: #{tpu_custom_call.1} parent=5 // pred_check_branch
        %179 = sbr.rel (%p176) target = $region12
      $region11: #{tpu_custom_call.1} parent=5 // pred_region
        %s180 = ssub.s32 %s14, 1
        // Predicated region
        $region13: #{tpu_custom_call.1} parent=11 // pred_check
          %p181 = pneg %p75
        $region14: #{tpu_custom_call.1} parent=11 // pred_check_branch
          %183 = sbr.rel (%p181) target = $region16
        $region15: #{tpu_custom_call.1} parent=11 // pred_region
          _
        $region16: #{tpu_custom_call.1} parent=11 // pred_fallthru
          _
        // Predicated region
        $region17: #{tpu_custom_call.1} parent=11 // pred_check
          %p184 = pneg %p96
        $region18: #{tpu_custom_call.1} parent=11 // pred_check_branch
          %186 = sbr.rel (%p184) target = $region20
        $region19: #{tpu_custom_call.1} parent=11 // pred_region
          _
        $region20: #{tpu_custom_call.1} parent=11 // pred_fallthru
          _
        // Predicated region
        $region21: #{tpu_custom_call.1} parent=11 // pred_check
          %p187 = pneg %p117
        $region22: #{tpu_custom_call.1} parent=11 // pred_check_branch
          %189 = sbr.rel (%p187) target = $region24
        $region23: #{tpu_custom_call.1} parent=11 // pred_region
          _
        $region24: #{tpu_custom_call.1} parent=11 // pred_fallthru
          _
        // Predicated region
        $region25: #{tpu_custom_call.1} parent=11 // pred_check
          %p190 = pneg %p138
        $region26: #{tpu_custom_call.1} parent=11 // pred_check_branch
          %192 = sbr.rel (%p190) target = $region28
        $region27: #{tpu_custom_call.1} parent=11 // pred_region
          _
        $region28: #{tpu_custom_call.1} parent=11 // pred_fallthru
          _
      $region12: #{tpu_custom_call.1} parent=5 // pred_fallthru
        _
      %p193 = scmp.lt.s32.totalorder %s14, 2
      // Predicated region
      $region29: #{tpu_custom_call.1} parent=5 // pred_check
        %p194 = pneg %p193
      $region30: #{tpu_custom_call.1} parent=5 // pred_check_branch
        %196 = sbr.rel (%p194) target = $region32
      $region31: #{tpu_custom_call.1} parent=5 // pred_region
        // Predicated region
        $region33: #{tpu_custom_call.1} parent=31 // pred_check
          %p197 = pneg %p48
        $region34: #{tpu_custom_call.1} parent=31 // pred_check_branch
          %199 = sbr.rel (%p197) target = $region36
        $region35: #{tpu_custom_call.1} parent=31 // pred_region
          %s200 = smul.u32 2, %s22
          %p201 = scmp.lt.s32.totalorder %s21, 1
          %s202 = scalar_select %p201, %s21, 1
          %p203 = scmp.lt.s32.totalorder %s200, 1
          %s204 = scalar_select %p203, %s200, 1
          %s205 = smul.addr %s202, 4
          %s206 = sadd.s32 %s204, %s205
          %s207 = smul.addr %s206, 8
          %s208 = scalar_lea.vmem %s0, %s207
          %s209 = smul.u32 2, %s22
        $region36: #{tpu_custom_call.1} parent=31 // pred_fallthru
          _
      $region32: #{tpu_custom_call.1} parent=5 // pred_fallthru
        _
      %p210 = scmp.le.s32.totalorder 1, %s14
      %p211 = scmp.lt.s32.totalorder %s14, 3
      %p212 = pnand %p210, %p211
      %p213 = pneg %p212
      // Predicated region
      $region37: #{tpu_custom_call.1} parent=5 // pred_check
        _
      $region38: #{tpu_custom_call.1} parent=5 // pred_check_branch
        %215 = sbr.rel (%p212) target = $region40
      $region39: #{tpu_custom_call.1} parent=5 // pred_region
        %s216 = ssub.s32 %s14, 1
        %s217 = smul.u32 2, %s24
        %p218 = scmp.lt.s32.totalorder %s23, 1
        %s219 = scalar_select %p218, %s23, 1
        %p220 = scmp.lt.s32.totalorder %s217, 1
        %s221 = scalar_select %p220, %s217, 1
        %s222 = smul.addr %s219, 4
        %s223 = sadd.s32 %s221, %s222
        %s224 = smul.addr %s223, 8
        %s225 = scalar_lea.vmem %s0, %s224
        %p226 = pneg %p54
        %p227 = pneg %p51
        %p228 = pneg %p75
        %p229 = pneg %p72
        %p230 = pneg %p96
        %p231 = pneg %p93
        %p232 = pneg %p117
        %p233 = pneg %p114
        %p234 = pneg %p138
        %p235 = pneg %p135
        %p236 = pneg %p166
        %p237 = pneg %p163
        %s238 = sand.u32 %s153, 1
        %s239 = scalar_lea.sflag [#allocation3], %s238
        %s240 = sand.u32 %s153, 1
        %s241 = smul.addr %s240, 8
        %s242 = scalar_lea.vmem [#allocation2], %s241
        %s243 = smul.u32 2, %s24
        %p244 = scmp.lt.s32.totalorder %s23, 1
        %s245 = scalar_select %p244, %s23, 1
        %p246 = scmp.lt.s32.totalorder %s243, 1
        %s247 = scalar_select %p246, %s243, 1
        %s248 = smul.addr %s245, 4
        %s249 = sadd.s32 %s247, %s248
        %s250 = smul.addr %s249, 8
        %s251 = scalar_lea.vmem %s0, %s250
        %s252 = smul.u32 2, %s24
        %s253 = smul.u32 2, %s24
        %v255 = vld [vmem:[%s1] sm:$0xff]
        %v256 = vld [vmem:[%s1 + $0x8] sm:$0xff]
        %v257 = vld [vmem:[%s1 + $0x10] sm:$0xff]
        %v258 = vld [vmem:[%s1 + $0x18] sm:$0xff]
        %v259 = vld [vmem:[%s1 + $0x20] sm:$0xff]
        %v260 = vld [vmem:[%s1 + $0x28] sm:$0xff]
        %v261 = vld [vmem:[%s1 + $0x30] sm:$0xff]
        %v262 = vld [vmem:[%s1 + $0x38] sm:$0xff]
        %v263 = vld [vmem:[%s1 + $0x40] sm:$0xff]
        %v264 = vld [vmem:[%s1 + $0x48] sm:$0xff]
        %v265 = vld [vmem:[%s1 + $0x50] sm:$0xff]
        %v266 = vld [vmem:[%s1 + $0x58] sm:$0xff]
        %v267 = vld [vmem:[%s1 + $0x60] sm:$0xff]
        %v268 = vld [vmem:[%s1 + $0x68] sm:$0xff]
        %v269 = vld [vmem:[%s1 + $0x70] sm:$0xff]
        %v270 = vld [vmem:[%s1 + $0x78] sm:$0xff]
        %v271 = vld [vmem:[%s1 + $0x80] sm:$0xff]
        %v272 = vld [vmem:[%s1 + $0x88] sm:$0xff]
        %v273 = vld [vmem:[%s1 + $0x90] sm:$0xff]
        %v274 = vld [vmem:[%s1 + $0x98] sm:$0xff]
        %v275 = vld [vmem:[%s1 + $0xa0] sm:$0xff]
        %v276 = vld [vmem:[%s1 + $0xa8] sm:$0xff]
        %v277 = vld [vmem:[%s1 + $0xb0] sm:$0xff]
        %v278 = vld [vmem:[%s1 + $0xb8] sm:$0xff]
        %v279 = vld [vmem:[%s1 + $0xc0] sm:$0xff]
        %v280 = vld [vmem:[%s1 + $0xc8] sm:$0xff]
        %v281 = vld [vmem:[%s1 + $0xd0] sm:$0xff]
        %v282 = vld [vmem:[%s1 + $0xd8] sm:$0xff]
        %v283 = vld [vmem:[%s1 + $0xe0] sm:$0xff]
        %v284 = vld [vmem:[%s1 + $0xe8] sm:$0xff]
        %v285 = vld [vmem:[%s1 + $0xf0] sm:$0xff]
        %v286 = vld [vmem:[%s1 + $0xf8] sm:$0xff]
        %v287 = vpack.c.bf16 %v256, %v255
        %v288 = vpack.c.bf16 %v258, %v257
        %v289 = vpack.c.bf16 %v260, %v259
        %v290 = vpack.c.bf16 %v262, %v261
        %v291 = vpack.c.bf16 %v264, %v263
        %v292 = vpack.c.bf16 %v266, %v265
        %v293 = vpack.c.bf16 %v268, %v267
        %v294 = vpack.c.bf16 %v270, %v269
        %v295 = vpack.c.bf16 %v272, %v271
        %v296 = vpack.c.bf16 %v274, %v273
        %v297 = vpack.c.bf16 %v276, %v275
        %v298 = vpack.c.bf16 %v278, %v277
        %v299 = vpack.c.bf16 %v280, %v279
        %v300 = vpack.c.bf16 %v282, %v281
        %v301 = vpack.c.bf16 %v284, %v283
        %v302 = vpack.c.bf16 %v286, %v285
        %v303 = vld [vmem:[%s3] sm:$0xff]
        %v305 = vcombine.high %v303, %v303
        %v307 = vpack.c.bf16 %v303, %v303
        %v308 = vpack.c.bf16 %v305, %v305
        %v309 = vld [vmem:[%s2] sm:$0xff]
        %v310 = vld [vmem:[%s2 + $0x8] sm:$0xff]
        %v311 = vld [vmem:[%s2 + $0x10] sm:$0xff]
        %v312 = vld [vmem:[%s2 + $0x18] sm:$0xff]
        %v313 = vld [vmem:[%s2 + $0x20] sm:$0xff]
        %v314 = vld [vmem:[%s2 + $0x28] sm:$0xff]
        %v315 = vld [vmem:[%s2 + $0x30] sm:$0xff]
        %v316 = vld [vmem:[%s2 + $0x38] sm:$0xff]
        %v317 = vld [vmem:[%s2 + $0x40] sm:$0xff]
        %v318 = vld [vmem:[%s2 + $0x48] sm:$0xff]
        %v319 = vld [vmem:[%s2 + $0x50] sm:$0xff]
        %v320 = vld [vmem:[%s2 + $0x58] sm:$0xff]
        %v321 = vld [vmem:[%s2 + $0x60] sm:$0xff]
        %v322 = vld [vmem:[%s2 + $0x68] sm:$0xff]
        %v323 = vld [vmem:[%s2 + $0x70] sm:$0xff]
        %v324 = vld [vmem:[%s2 + $0x78] sm:$0xff]
        %v325 = vld [vmem:[%s2 + $0x80] sm:$0xff]
        %v326 = vld [vmem:[%s2 + $0x88] sm:$0xff]
        %v327 = vld [vmem:[%s2 + $0x90] sm:$0xff]
        %v328 = vld [vmem:[%s2 + $0x98] sm:$0xff]
        %v329 = vld [vmem:[%s2 + $0xa0] sm:$0xff]
        %v330 = vld [vmem:[%s2 + $0xa8] sm:$0xff]
        %v331 = vld [vmem:[%s2 + $0xb0] sm:$0xff]
        %v332 = vld [vmem:[%s2 + $0xb8] sm:$0xff]
        %v333 = vld [vmem:[%s2 + $0xc0] sm:$0xff]
        %v334 = vld [vmem:[%s2 + $0xc8] sm:$0xff]
        %v335 = vld [vmem:[%s2 + $0xd0] sm:$0xff]
        %v336 = vld [vmem:[%s2 + $0xd8] sm:$0xff]
        %v337 = vld [vmem:[%s2 + $0xe0] sm:$0xff]
        %v338 = vld [vmem:[%s2 + $0xe8] sm:$0xff]
        %v339 = vld [vmem:[%s2 + $0xf0] sm:$0xff]
        %v340 = vld [vmem:[%s2 + $0xf8] sm:$0xff]
        %v341 = vld [vmem:[%s4] sm:$0xf]
        %v342 = vld [vmem:[%s251] sm:$0xff]
        %v343 = vld [vmem:[%s251 + $0x10] sm:$0xf]
        %v344 = vpack.c.bf16 %v343, %v342
        %346 = vset.pattern.permute.xlu0 0
        %347 = vperm.xlu0 %346, %v309
        %v348 = vpop.permute.xlu0 %347
        %351 = vset.pattern.permute.xlu0 0
        %352 = vperm.xlu0 %351, %v310
        %v353 = vpop.permute.xlu0 %352
        %356 = vset.pattern.permute.xlu0 0
        %357 = vperm.xlu0 %356, %v311
        %v358 = vpop.permute.xlu0 %357
        %361 = vset.pattern.permute.xlu0 0
        %362 = vperm.xlu0 %361, %v312
        %v363 = vpop.permute.xlu0 %362
        %366 = vset.pattern.permute.xlu0 0
        %367 = vperm.xlu0 %366, %v313
        %v368 = vpop.permute.xlu0 %367
        %371 = vset.pattern.permute.xlu0 0
        %372 = vperm.xlu0 %371, %v314
        %v373 = vpop.permute.xlu0 %372
        %376 = vset.pattern.permute.xlu0 0
        %377 = vperm.xlu0 %376, %v315
        %v378 = vpop.permute.xlu0 %377
        %381 = vset.pattern.permute.xlu0 0
        %382 = vperm.xlu0 %381, %v316
        %v383 = vpop.permute.xlu0 %382
        %386 = vset.pattern.permute.xlu0 0
        %387 = vperm.xlu0 %386, %v317
        %v388 = vpop.permute.xlu0 %387
        %391 = vset.pattern.permute.xlu0 0
        %392 = vperm.xlu0 %391, %v318
        %v393 = vpop.permute.xlu0 %392
        %396 = vset.pattern.permute.xlu0 0
        %397 = vperm.xlu0 %396, %v319
        %v398 = vpop.permute.xlu0 %397
        %401 = vset.pattern.permute.xlu0 0
        %402 = vperm.xlu0 %401, %v320
        %v403 = vpop.permute.xlu0 %402
        %406 = vset.pattern.permute.xlu0 0
        %407 = vperm.xlu0 %406, %v321
        %v408 = vpop.permute.xlu0 %407
        %411 = vset.pattern.permute.xlu0 0
        %412 = vperm.xlu0 %411, %v322
        %v413 = vpop.permute.xlu0 %412
        %416 = vset.pattern.permute.xlu0 0
        %417 = vperm.xlu0 %416, %v323
        %v418 = vpop.permute.xlu0 %417
        %421 = vset.pattern.permute.xlu0 0
        %422 = vperm.xlu0 %421, %v324
        %v423 = vpop.permute.xlu0 %422
        %426 = vset.pattern.permute.xlu0 0
        %427 = vperm.xlu0 %426, %v325
        %v428 = vpop.permute.xlu0 %427
        %431 = vset.pattern.permute.xlu0 0
        %432 = vperm.xlu0 %431, %v326
        %v433 = vpop.permute.xlu0 %432
        %436 = vset.pattern.permute.xlu0 0
        %437 = vperm.xlu0 %436, %v327
        %v438 = vpop.permute.xlu0 %437
        %441 = vset.pattern.permute.xlu0 0
        %442 = vperm.xlu0 %441, %v328
        %v443 = vpop.permute.xlu0 %442
        %446 = vset.pattern.permute.xlu0 0
        %447 = vperm.xlu0 %446, %v329
        %v448 = vpop.permute.xlu0 %447
        %451 = vset.pattern.permute.xlu0 0
        %452 = vperm.xlu0 %451, %v330
        %v453 = vpop.permute.xlu0 %452
        %456 = vset.pattern.permute.xlu0 0
        %457 = vperm.xlu0 %456, %v331
        %v458 = vpop.permute.xlu0 %457
        %461 = vset.pattern.permute.xlu0 0
        %462 = vperm.xlu0 %461, %v332
        %v463 = vpop.permute.xlu0 %462
        %466 = vset.pattern.permute.xlu0 0
        %467 = vperm.xlu0 %466, %v333
        %v468 = vpop.permute.xlu0 %467
        %471 = vset.pattern.permute.xlu0 0
        %472 = vperm.xlu0 %471, %v334
        %v473 = vpop.permute.xlu0 %472
        %476 = vset.pattern.permute.xlu0 0
        %477 = vperm.xlu0 %476, %v335
        %v478 = vpop.permute.xlu0 %477
        %481 = vset.pattern.permute.xlu0 0
        %482 = vperm.xlu0 %481, %v336
        %v483 = vpop.permute.xlu0 %482
        %486 = vset.pattern.permute.xlu0 0
        %487 = vperm.xlu0 %486, %v337
        %v488 = vpop.permute.xlu0 %487
        %491 = vset.pattern.permute.xlu0 0
        %492 = vperm.xlu0 %491, %v338
        %v493 = vpop.permute.xlu0 %492
        %496 = vset.pattern.permute.xlu0 0
        %497 = vperm.xlu0 %496, %v339
        %v498 = vpop.permute.xlu0 %497
        %501 = vset.pattern.permute.xlu0 0
        %502 = vperm.xlu0 %501, %v340
        %v503 = vpop.permute.xlu0 %502
        %vm505 = vcmask 97280
        %v507 = vsel %vm505, %v287, 0
        %v510 = vsel %vm505, %v288, 0
        %v513 = vsel %vm505, %v289, 0
        %v516 = vsel %vm505, %v290, 0
        %v519 = vsel %vm505, %v291, 0
        %v522 = vsel %vm505, %v292, 0
        %v525 = vsel %vm505, %v293, 0
        %v528 = vsel %vm505, %v294, 0
        %v531 = vsel %vm505, %v295, 0
        %v534 = vsel %vm505, %v296, 0
        %v537 = vsel %vm505, %v297, 0
        %v540 = vsel %vm505, %v298, 0
        %v543 = vsel %vm505, %v299, 0
        %v546 = vsel %vm505, %v300, 0
        %v549 = vsel %vm505, %v301, 0
        %v552 = vsel %vm505, %v302, 0
        %vm554 = vcmask 1045504
        %v556 = vsel %vm554, %v344, 0
        %558 = vmatprep.subr.bf16.mxu0 0
        %559 = vmatpush1.bf16.msra.mxu0 %v556
        %560 = vmatprep.subr.bf16.mxu0 0
        %561 = vmatpush1.bf16.msra.mxu0 0
        %562 = vmatprep.subr.bf16.mxu0 0
        %563 = vmatpush1.bf16.msra.mxu0 0
        %564 = vmatprep.subr.bf16.mxu0 0
        %565 = vmatpush1.bf16.msra.mxu0 0
        %566 = vmatprep.subr.bf16.mxu0 0
        %567 = vmatpush1.bf16.msra.mxu0 0
        %568 = vmatprep.subr.bf16.mxu0 0
        %569 = vmatpush1.bf16.msra.mxu0 0
        %570 = vmatprep.subr.bf16.mxu0 0
        %571 = vmatpush1.bf16.msra.mxu0 0
        %572 = vmatprep.subr.bf16.mxu0 0
        %573 = vmatpush1.bf16.msra.mxu0 0
        %574 = vmatprep.subr.bf16.mxu0 0
        %575 = vmatpush1.bf16.msra.mxu0 0
        %576 = vmatprep.subr.bf16.mxu0 0
        %577 = vmatpush1.bf16.msra.mxu0 0
        %578 = vmatprep.subr.bf16.mxu0 0
        %579 = vmatpush1.bf16.msra.mxu0 0
        %580 = vmatprep.subr.bf16.mxu0 0
        %581 = vmatpush1.bf16.msra.mxu0 0
        %582 = vmatprep.subr.bf16.mxu0 0
        %583 = vmatpush1.bf16.msra.mxu0 0
        %584 = vmatprep.subr.bf16.mxu0 0
        %585 = vmatpush1.bf16.msra.mxu0 0
        %586 = vmatprep.subr.bf16.mxu0 0
        %587 = vmatpush1.bf16.msra.mxu0 0
        %588 = vmatprep.subr.bf16.mxu0 0
        %589 = vmatpush1.bf16.msra.mxu0 0
        %590 = vmatprep.mubr.bf16.mxu0 0
        %591 = vmatmul.mubr.bf16.gmra.mrb[0].mxu0 %v507
        %v592 = vpop.f32.mrb[0].mxu0
        %v593 = vadd.f32 %v348, %v592
        %v594 = vpop.f32.mrb[0].mxu0
        %v595 = vpop.f32.mrb[0].mxu0
        %v596 = vadd.f32 %v353, %v595
        %v597 = vpop.f32.mrb[0].mxu0
        %598 = vmatprep.mubr.bf16.mxu0 0
        %599 = vmatmul.mubr.bf16.gmra.mrb[0].mxu0 %v510
        %v600 = vpop.f32.mrb[0].mxu0
        %v601 = vadd.f32 %v358, %v600
        %v602 = vpop.f32.mrb[0].mxu0
        %v603 = vpop.f32.mrb[0].mxu0
        %v604 = vadd.f32 %v363, %v603
        %v605 = vpop.f32.mrb[0].mxu0
        %606 = vmatprep.mubr.bf16.mxu0 0
        %607 = vmatmul.mubr.bf16.gmra.mrb[0].mxu0 %v513
        %v608 = vpop.f32.mrb[0].mxu0
        %v609 = vadd.f32 %v368, %v608
        %v610 = vpop.f32.mrb[0].mxu0
        %v611 = vpop.f32.mrb[0].mxu0
        %v612 = vadd.f32 %v373, %v611
        %v613 = vpop.f32.mrb[0].mxu0
        %614 = vmatprep.mubr.bf16.mxu0 0
        %615 = vmatmul.mubr.bf16.gmra.mrb[0].mxu0 %v516
        %v616 = vpop.f32.mrb[0].mxu0
        %v617 = vadd.f32 %v378, %v616
        %v618 = vpop.f32.mrb[0].mxu0
        %v619 = vpop.f32.mrb[0].mxu0
        %v620 = vadd.f32 %v383, %v619
        %v621 = vpop.f32.mrb[0].mxu0
        %622 = vmatprep.mubr.bf16.mxu0 0
        %623 = vmatmul.mubr.bf16.gmra.mrb[0].mxu0 %v519
        %v624 = vpop.f32.mrb[0].mxu0
        %v625 = vadd.f32 %v388, %v624
        %v626 = vpop.f32.mrb[0].mxu0
        %v627 = vpop.f32.mrb[0].mxu0
        %v628 = vadd.f32 %v393, %v627
        %v629 = vpop.f32.mrb[0].mxu0
        %630 = vmatprep.mubr.bf16.mxu0 0
        %631 = vmatmul.mubr.bf16.gmra.mrb[0].mxu0 %v522
        %v632 = vpop.f32.mrb[0].mxu0
        %v633 = vadd.f32 %v398, %v632
        %v634 = vpop.f32.mrb[0].mxu0
        %v635 = vpop.f32.mrb[0].mxu0
        %v636 = vadd.f32 %v403, %v635
        %v637 = vpop.f32.mrb[0].mxu0
        %638 = vmatprep.mubr.bf16.mxu0 0
        %639 = vmatmul.mubr.bf16.gmra.mrb[0].mxu0 %v525
        %v640 = vpop.f32.mrb[0].mxu0
        %v641 = vadd.f32 %v408, %v640
        %v642 = vpop.f32.mrb[0].mxu0
        %v643 = vpop.f32.mrb[0].mxu0
        %v644 = vadd.f32 %v413, %v643
        %v645 = vpop.f32.mrb[0].mxu0
        %646 = vmatprep.mubr.bf16.mxu0 0
        %647 = vmatmul.mubr.bf16.gmra.mrb[0].mxu0 %v528
        %v648 = vpop.f32.mrb[0].mxu0
        %v649 = vadd.f32 %v418, %v648
        %v650 = vpop.f32.mrb[0].mxu0
        %v651 = vpop.f32.mrb[0].mxu0
        %v652 = vadd.f32 %v423, %v651
        %v653 = vpop.f32.mrb[0].mxu0
        %654 = vmatprep.mubr.bf16.mxu0 0
        %655 = vmatmul.mubr.bf16.gmra.mrb[0].mxu0 %v531
        %v656 = vpop.f32.mrb[0].mxu0
        %v657 = vadd.f32 %v428, %v656
        %v658 = vpop.f32.mrb[0].mxu0
        %v659 = vpop.f32.mrb[0].mxu0
        %v660 = vadd.f32 %v433, %v659
        %v661 = vpop.f32.mrb[0].mxu0
        %662 = vmatprep.mubr.bf16.mxu0 0
        %663 = vmatmul.mubr.bf16.gmra.mrb[0].mxu0 %v534
        %v664 = vpop.f32.mrb[0].mxu0
        %v665 = vadd.f32 %v438, %v664
        %v666 = vpop.f32.mrb[0].mxu0
        %v667 = vpop.f32.mrb[0].mxu0
        %v668 = vadd.f32 %v443, %v667
        %v669 = vpop.f32.mrb[0].mxu0
        %670 = vmatprep.mubr.bf16.mxu0 0
        %671 = vmatmul.mubr.bf16.gmra.mrb[0].mxu0 %v537
        %v672 = vpop.f32.mrb[0].mxu0
        %v673 = vadd.f32 %v448, %v672
        %v674 = vpop.f32.mrb[0].mxu0
        %v675 = vpop.f32.mrb[0].mxu0
        %v676 = vadd.f32 %v453, %v675
        %v677 = vpop.f32.mrb[0].mxu0
        %678 = vmatprep.mubr.bf16.mxu0 0
        %679 = vmatmul.mubr.bf16.gmra.mrb[0].mxu0 %v540
        %v680 = vpop.f32.mrb[0].mxu0
        %v681 = vadd.f32 %v458, %v680
        %v682 = vpop.f32.mrb[0].mxu0
        %v683 = vpop.f32.mrb[0].mxu0
        %v684 = vadd.f32 %v463, %v683
        %v685 = vpop.f32.mrb[0].mxu0
        %686 = vmatprep.mubr.bf16.mxu0 0
        %687 = vmatmul.mubr.bf16.gmra.mrb[0].mxu0 %v543
        %v688 = vpop.f32.mrb[0].mxu0
        %v689 = vadd.f32 %v468, %v688
        %v690 = vpop.f32.mrb[0].mxu0
        %v691 = vpop.f32.mrb[0].mxu0
        %v692 = vadd.f32 %v473, %v691
        %v693 = vpop.f32.mrb[0].mxu0
        %694 = vmatprep.mubr.bf16.mxu0 0
        %695 = vmatmul.mubr.bf16.gmra.mrb[0].mxu0 %v546
        %v696 = vpop.f32.mrb[0].mxu0
        %v697 = vadd.f32 %v478, %v696
        %v698 = vpop.f32.mrb[0].mxu0
        %v699 = vpop.f32.mrb[0].mxu0
        %v700 = vadd.f32 %v483, %v699
        %v701 = vpop.f32.mrb[0].mxu0
        %702 = vmatprep.mubr.bf16.mxu0 0
        %703 = vmatmul.mubr.bf16.gmra.mrb[0].mxu0 %v549
        %v704 = vpop.f32.mrb[0].mxu0
        %v705 = vadd.f32 %v488, %v704
        %v706 = vpop.f32.mrb[0].mxu0
        %v707 = vpop.f32.mrb[0].mxu0
        %v708 = vadd.f32 %v493, %v707
        %v709 = vpop.f32.mrb[0].mxu0
        %710 = vmatprep.mubr.bf16.mxu0 0
        %711 = vmatmul.mubr.bf16.gmra.mrb[0].mxu0 %v552
        %v712 = vpop.f32.mrb[0].mxu0
        %v713 = vadd.f32 %v498, %v712
        %v714 = vpop.f32.mrb[0].mxu0
        %v715 = vpop.f32.mrb[0].mxu0
        %v716 = vadd.f32 %v503, %v715
        %v717 = vpop.f32.mrb[0].mxu0
        %718 = vdwg.mxu0
        %v719 = vmax.f32 %v593, 0.0
        %v720 = vmax.f32 %v596, 0.0
        %v721 = vmax.f32 %v601, 0.0
        %v722 = vmax.f32 %v604, 0.0
        %v723 = vmax.f32 %v609, 0.0
        %v724 = vmax.f32 %v612, 0.0
        %v725 = vmax.f32 %v617, 0.0
        %v726 = vmax.f32 %v620, 0.0
        %v727 = vmax.f32 %v625, 0.0
        %v728 = vmax.f32 %v628, 0.0
        %v729 = vmax.f32 %v633, 0.0
        %v730 = vmax.f32 %v636, 0.0
        %v731 = vmax.f32 %v641, 0.0
        %v732 = vmax.f32 %v644, 0.0
        %v733 = vmax.f32 %v649, 0.0
        %v734 = vmax.f32 %v652, 0.0
        %v735 = vmax.f32 %v657, 0.0
        %v736 = vmax.f32 %v660, 0.0
        %v737 = vmax.f32 %v665, 0.0
        %v738 = vmax.f32 %v668, 0.0
        %v739 = vmax.f32 %v673, 0.0
        %v740 = vmax.f32 %v676, 0.0
        %v741 = vmax.f32 %v681, 0.0
        %v742 = vmax.f32 %v684, 0.0
        %v743 = vmax.f32 %v689, 0.0
        %v744 = vmax.f32 %v692, 0.0
        %v745 = vmax.f32 %v697, 0.0
        %v746 = vmax.f32 %v700, 0.0
        %v747 = vmax.f32 %v705, 0.0
        %v748 = vmax.f32 %v708, 0.0
        %v749 = vmax.f32 %v713, 0.0
        %v750 = vmax.f32 %v716, 0.0
        %v751 = vpack.c.bf16 %v720, %v719
        %v752 = vpack.c.bf16 %v722, %v721
        %v753 = vpack.c.bf16 %v724, %v723
        %v754 = vpack.c.bf16 %v726, %v725
        %v755 = vpack.c.bf16 %v728, %v727
        %v756 = vpack.c.bf16 %v730, %v729
        %v757 = vpack.c.bf16 %v732, %v731
        %v758 = vpack.c.bf16 %v734, %v733
        %v759 = vpack.c.bf16 %v736, %v735
        %v760 = vpack.c.bf16 %v738, %v737
        %v761 = vpack.c.bf16 %v740, %v739
        %v762 = vpack.c.bf16 %v742, %v741
        %v763 = vpack.c.bf16 %v744, %v743
        %v764 = vpack.c.bf16 %v746, %v745
        %v765 = vpack.c.bf16 %v748, %v747
        %v766 = vpack.c.bf16 %v750, %v749
        %768 = vset.pattern.permute.xlu0 0
        %769 = vperm.xlu0 %768, %v341
        %v770 = vpop.permute.xlu0 %769
        %772 = vmatprep.subr.bf16.mxu0 0
        %773 = vmatpush1.bf16.msra.mxu0 %v751
        %774 = vmatprep.subr.bf16.mxu0 0
        %775 = vmatpush1.bf16.msra.mxu0 %v752
        %776 = vmatprep.subr.bf16.mxu0 0
        %777 = vmatpush1.bf16.msra.mxu0 %v753
        %778 = vmatprep.subr.bf16.mxu0 0
        %779 = vmatpush1.bf16.msra.mxu0 %v754
        %780 = vmatprep.subr.bf16.mxu0 0
        %781 = vmatpush1.bf16.msra.mxu0 %v755
        %782 = vmatprep.subr.bf16.mxu0 0
        %783 = vmatpush1.bf16.msra.mxu0 %v756
        %784 = vmatprep.subr.bf16.mxu0 0
        %785 = vmatpush1.bf16.msra.mxu0 %v757
        %786 = vmatprep.subr.bf16.mxu0 0
        %787 = vmatpush1.bf16.msra.mxu0 %v758
        %788 = vmatprep.subr.bf16.mxu0 0
        %789 = vmatpush1.bf16.msra.mxu0 %v759
        %790 = vmatprep.subr.bf16.mxu0 0
        %791 = vmatpush1.bf16.msra.mxu0 %v760
        %792 = vmatprep.subr.bf16.mxu0 0
        %793 = vmatpush1.bf16.msra.mxu0 %v761
        %794 = vmatprep.subr.bf16.mxu0 0
        %795 = vmatpush1.bf16.msra.mxu0 %v762
        %796 = vmatprep.subr.bf16.mxu0 0
        %797 = vmatpush1.bf16.msra.mxu0 %v763
        %798 = vmatprep.subr.bf16.mxu0 0
        %799 = vmatpush1.bf16.msra.mxu0 %v764
        %800 = vmatprep.subr.bf16.mxu0 0
        %801 = vmatpush1.bf16.msra.mxu0 %v765
        %802 = vmatprep.subr.bf16.mxu0 0
        %803 = vmatpush1.bf16.msra.mxu0 %v766
        %804 = vmatprep.mubr.bf16.mxu0 %v308
        %805 = vmatmul.mubr.bf16.gmra.mrb[0].mxu0 %v307
        %v806 = vpop.f32.mrb[0].mxu0
        %v807 = vadd.f32 %v770, %v806
        %v808 = vpop.f32.mrb[0].mxu0
        %v809 = vpop.f32.mrb[0].mxu0
        %v810 = vpop.f32.mrb[0].mxu0
        %811 = vdwg.mxu0
        %812 = vst [vmem:[%s242] sm:$0xf] %v807
        %s813 = scalar_lea.vmem %s251, 8
        %v814 = vld [vmem:[%s813] sm:$0xff]
        %v815 = vld [vmem:[%s813 + $0x10] sm:$0xf]
        %v816 = vpack.c.bf16 %v815, %v814
        %v818 = vsel %vm554, %v816, 0
        %820 = vmatprep.subr.bf16.mxu0 0
        %821 = vmatpush1.bf16.msra.mxu0 %v818
        %822 = vmatprep.subr.bf16.mxu0 0
        %823 = vmatpush1.bf16.msra.mxu0 0
        %824 = vmatprep.subr.bf16.mxu0 0
        %825 = vmatpush1.bf16.msra.mxu0 0
        %826 = vmatprep.subr.bf16.mxu0 0
        %827 = vmatpush1.bf16.msra.mxu0 0
        %828 = vmatprep.subr.bf16.mxu0 0
        %829 = vmatpush1.bf16.msra.mxu0 0
        %830 = vmatprep.subr.bf16.mxu0 0
        %831 = vmatpush1.bf16.msra.mxu0 0
        %832 = vmatprep.subr.bf16.mxu0 0
        %833 = vmatpush1.bf16.msra.mxu0 0
        %834 = vmatprep.subr.bf16.mxu0 0
        %835 = vmatpush1.bf16.msra.mxu0 0
        %836 = vmatprep.subr.bf16.mxu0 0
        %837 = vmatpush1.bf16.msra.mxu0 0
        %838 = vmatprep.subr.bf16.mxu0 0
        %839 = vmatpush1.bf16.msra.mxu0 0
        %840 = vmatprep.subr.bf16.mxu0 0
        %841 = vmatpush1.bf16.msra.mxu0 0
        %842 = vmatprep.subr.bf16.mxu0 0
        %843 = vmatpush1.bf16.msra.mxu0 0
        %844 = vmatprep.subr.bf16.mxu0 0
        %845 = vmatpush1.bf16.msra.mxu0 0
        %846 = vmatprep.subr.bf16.mxu0 0
        %847 = vmatpush1.bf16.msra.mxu0 0
        %848 = vmatprep.subr.bf16.mxu0 0
        %849 = vmatpush1.bf16.msra.mxu0 0
        %850 = vmatprep.subr.bf16.mxu0 0
        %851 = vmatpush1.bf16.msra.mxu0 0
        %852 = vmatprep.mubr.bf16.mxu0 0
        %853 = vmatmul.mubr.bf16.gmra.mrb[0].mxu0 %v507
        %v854 = vpop.f32.mrb[0].mxu0
        %v855 = vadd.f32 %v348, %v854
        %v856 = vpop.f32.mrb[0].mxu0
        %v857 = vpop.f32.mrb[0].mxu0
        %v858 = vadd.f32 %v353, %v857
        %v859 = vpop.f32.mrb[0].mxu0
        %860 = vmatprep.mubr.bf16.mxu0 0
        %861 = vmatmul.mubr.bf16.gmra.mrb[0].mxu0 %v510
        %v862 = vpop.f32.mrb[0].mxu0
        %v863 = vadd.f32 %v358, %v862
        %v864 = vpop.f32.mrb[0].mxu0
        %v865 = vpop.f32.mrb[0].mxu0
        %v866 = vadd.f32 %v363, %v865
        %v867 = vpop.f32.mrb[0].mxu0
        %868 = vmatprep.mubr.bf16.mxu0 0
        %869 = vmatmul.mubr.bf16.gmra.mrb[0].mxu0 %v513
        %v870 = vpop.f32.mrb[0].mxu0
        %v871 = vadd.f32 %v368, %v870
        %v872 = vpop.f32.mrb[0].mxu0
        %v873 = vpop.f32.mrb[0].mxu0
        %v874 = vadd.f32 %v373, %v873
        %v875 = vpop.f32.mrb[0].mxu0
        %876 = vmatprep.mubr.bf16.mxu0 0
        %877 = vmatmul.mubr.bf16.gmra.mrb[0].mxu0 %v516
        %v878 = vpop.f32.mrb[0].mxu0
        %v879 = vadd.f32 %v378, %v878
        %v880 = vpop.f32.mrb[0].mxu0
        %v881 = vpop.f32.mrb[0].mxu0
        %v882 = vadd.f32 %v383, %v881
        %v883 = vpop.f32.mrb[0].mxu0
        %884 = vmatprep.mubr.bf16.mxu0 0
        %885 = vmatmul.mubr.bf16.gmra.mrb[0].mxu0 %v519
        %v886 = vpop.f32.mrb[0].mxu0
        %v887 = vadd.f32 %v388, %v886
        %v888 = vpop.f32.mrb[0].mxu0
        %v889 = vpop.f32.mrb[0].mxu0
        %v890 = vadd.f32 %v393, %v889
        %v891 = vpop.f32.mrb[0].mxu0
        %892 = vmatprep.mubr.bf16.mxu0 0
        %893 = vmatmul.mubr.bf16.gmra.mrb[0].mxu0 %v522
        %v894 = vpop.f32.mrb[0].mxu0
        %v895 = vadd.f32 %v398, %v894
        %v896 = vpop.f32.mrb[0].mxu0
        %v897 = vpop.f32.mrb[0].mxu0
        %v898 = vadd.f32 %v403, %v897
        %v899 = vpop.f32.mrb[0].mxu0
        %900 = vmatprep.mubr.bf16.mxu0 0
        %901 = vmatmul.mubr.bf16.gmra.mrb[0].mxu0 %v525
        %v902 = vpop.f32.mrb[0].mxu0
        %v903 = vadd.f32 %v408, %v902
        %v904 = vpop.f32.mrb[0].mxu0
        %v905 = vpop.f32.mrb[0].mxu0
        %v906 = vadd.f32 %v413, %v905
        %v907 = vpop.f32.mrb[0].mxu0
        %908 = vmatprep.mubr.bf16.mxu0 0
        %909 = vmatmul.mubr.bf16.gmra.mrb[0].mxu0 %v528
        %v910 = vpop.f32.mrb[0].mxu0
        %v911 = vadd.f32 %v418, %v910
        %v912 = vpop.f32.mrb[0].mxu0
        %v913 = vpop.f32.mrb[0].mxu0
        %v914 = vadd.f32 %v423, %v913
        %v915 = vpop.f32.mrb[0].mxu0
        %916 = vmatprep.mubr.bf16.mxu0 0
        %917 = vmatmul.mubr.bf16.gmra.mrb[0].mxu0 %v531
        %v918 = vpop.f32.mrb[0].mxu0
        %v919 = vadd.f32 %v428, %v918
        %v920 = vpop.f32.mrb[0].mxu0
        %v921 = vpop.f32.mrb[0].mxu0
        %v922 = vadd.f32 %v433, %v921
        %v923 = vpop.f32.mrb[0].mxu0
        %924 = vmatprep.mubr.bf16.mxu0 0
        %925 = vmatmul.mubr.bf16.gmra.mrb[0].mxu0 %v534
        %v926 = vpop.f32.mrb[0].mxu0
        %v927 = vadd.f32 %v438, %v926
        %v928 = vpop.f32.mrb[0].mxu0
        %v929 = vpop.f32.mrb[0].mxu0
        %v930 = vadd.f32 %v443, %v929
        %v931 = vpop.f32.mrb[0].mxu0
        %932 = vmatprep.mubr.bf16.mxu0 0
        %933 = vmatmul.mubr.bf16.gmra.mrb[0].mxu0 %v537
        %v934 = vpop.f32.mrb[0].mxu0
        %v935 = vadd.f32 %v448, %v934
        %v936 = vpop.f32.mrb[0].mxu0
        %v937 = vpop.f32.mrb[0].mxu0
        %v938 = vadd.f32 %v453, %v937
        %v939 = vpop.f32.mrb[0].mxu0
        %940 = vmatprep.mubr.bf16.mxu0 0
        %941 = vmatmul.mubr.bf16.gmra.mrb[0].mxu0 %v540
        %v942 = vpop.f32.mrb[0].mxu0
        %v943 = vadd.f32 %v458, %v942
        %v944 = vpop.f32.mrb[0].mxu0
        %v945 = vpop.f32.mrb[0].mxu0
        %v946 = vadd.f32 %v463, %v945
        %v947 = vpop.f32.mrb[0].mxu0
        %948 = vmatprep.mubr.bf16.mxu0 0
        %949 = vmatmul.mubr.bf16.gmra.mrb[0].mxu0 %v543
        %v950 = vpop.f32.mrb[0].mxu0
        %v951 = vadd.f32 %v468, %v950
        %v952 = vpop.f32.mrb[0].mxu0
        %v953 = vpop.f32.mrb[0].mxu0
        %v954 = vadd.f32 %v473, %v953
        %v955 = vpop.f32.mrb[0].mxu0
        %956 = vmatprep.mubr.bf16.mxu0 0
        %957 = vmatmul.mubr.bf16.gmra.mrb[0].mxu0 %v546
        %v958 = vpop.f32.mrb[0].mxu0
        %v959 = vadd.f32 %v478, %v958
        %v960 = vpop.f32.mrb[0].mxu0
        %v961 = vpop.f32.mrb[0].mxu0
        %v962 = vadd.f32 %v483, %v961
        %v963 = vpop.f32.mrb[0].mxu0
        %964 = vmatprep.mubr.bf16.mxu0 0
        %965 = vmatmul.mubr.bf16.gmra.mrb[0].mxu0 %v549
        %v966 = vpop.f32.mrb[0].mxu0
        %v967 = vadd.f32 %v488, %v966
        %v968 = vpop.f32.mrb[0].mxu0
        %v969 = vpop.f32.mrb[0].mxu0
        %v970 = vadd.f32 %v493, %v969
        %v971 = vpop.f32.mrb[0].mxu0
        %972 = vmatprep.mubr.bf16.mxu0 0
        %973 = vmatmul.mubr.bf16.gmra.mrb[0].mxu0 %v552
        %v974 = vpop.f32.mrb[0].mxu0
        %v975 = vadd.f32 %v498, %v974
        %v976 = vpop.f32.mrb[0].mxu0
        %v977 = vpop.f32.mrb[0].mxu0
        %v978 = vadd.f32 %v503, %v977
        %v979 = vpop.f32.mrb[0].mxu0
        %980 = vdwg.mxu0
        %v981 = vmax.f32 %v855, 0.0
        %v982 = vmax.f32 %v858, 0.0
        %v983 = vmax.f32 %v863, 0.0
        %v984 = vmax.f32 %v866, 0.0
        %v985 = vmax.f32 %v871, 0.0
        %v986 = vmax.f32 %v874, 0.0
        %v987 = vmax.f32 %v879, 0.0
        %v988 = vmax.f32 %v882, 0.0
        %v989 = vmax.f32 %v887, 0.0
        %v990 = vmax.f32 %v890, 0.0
        %v991 = vmax.f32 %v895, 0.0
        %v992 = vmax.f32 %v898, 0.0
        %v993 = vmax.f32 %v903, 0.0
        %v994 = vmax.f32 %v906, 0.0
        %v995 = vmax.f32 %v911, 0.0
        %v996 = vmax.f32 %v914, 0.0
        %v997 = vmax.f32 %v919, 0.0
        %v998 = vmax.f32 %v922, 0.0
        %v999 = vmax.f32 %v927, 0.0
        %v1000 = vmax.f32 %v930, 0.0
        %v1001 = vmax.f32 %v935, 0.0
        %v1002 = vmax.f32 %v938, 0.0
        %v1003 = vmax.f32 %v943, 0.0
        %v1004 = vmax.f32 %v946, 0.0
        %v1005 = vmax.f32 %v951, 0.0
        %v1006 = vmax.f32 %v954, 0.0
        %v1007 = vmax.f32 %v959, 0.0
        %v1008 = vmax.f32 %v962, 0.0
        %v1009 = vmax.f32 %v967, 0.0
        %v1010 = vmax.f32 %v970, 0.0
        %v1011 = vmax.f32 %v975, 0.0
        %v1012 = vmax.f32 %v978, 0.0
        %v1013 = vpack.c.bf16 %v982, %v981
        %v1014 = vpack.c.bf16 %v984, %v983
        %v1015 = vpack.c.bf16 %v986, %v985
        %v1016 = vpack.c.bf16 %v988, %v987
        %v1017 = vpack.c.bf16 %v990, %v989
        %v1018 = vpack.c.bf16 %v992, %v991
        %v1019 = vpack.c.bf16 %v994, %v993
        %v1020 = vpack.c.bf16 %v996, %v995
        %v1021 = vpack.c.bf16 %v998, %v997
        %v1022 = vpack.c.bf16 %v1000, %v999
        %v1023 = vpack.c.bf16 %v1002, %v1001
        %v1024 = vpack.c.bf16 %v1004, %v1003
        %v1025 = vpack.c.bf16 %v1006, %v1005
        %v1026 = vpack.c.bf16 %v1008, %v1007
        %v1027 = vpack.c.bf16 %v1010, %v1009
        %v1028 = vpack.c.bf16 %v1012, %v1011
        %1029 = vmatprep.subr.bf16.mxu0 0
        %1030 = vmatpush1.bf16.msra.mxu0 %v1013
        %1031 = vmatprep.subr.bf16.mxu0 0
        %1032 = vmatpush1.bf16.msra.mxu0 %v1014
        %1033 = vmatprep.subr.bf16.mxu0 0
        %1034 = vmatpush1.bf16.msra.mxu0 %v1015
        %1035 = vmatprep.subr.bf16.mxu0 0
        %1036 = vmatpush1.bf16.msra.mxu0 %v1016
        %1037 = vmatprep.subr.bf16.mxu0 0
        %1038 = vmatpush1.bf16.msra.mxu0 %v1017
        %1039 = vmatprep.subr.bf16.mxu0 0
        %1040 = vmatpush1.bf16.msra.mxu0 %v1018
        %1041 = vmatprep.subr.bf16.mxu0 0
        %1042 = vmatpush1.bf16.msra.mxu0 %v1019
        %1043 = vmatprep.subr.bf16.mxu0 0
        %1044 = vmatpush1.bf16.msra.mxu0 %v1020
        %1045 = vmatprep.subr.bf16.mxu0 0
        %1046 = vmatpush1.bf16.msra.mxu0 %v1021
        %1047 = vmatprep.subr.bf16.mxu0 0
        %1048 = vmatpush1.bf16.msra.mxu0 %v1022
        %1049 = vmatprep.subr.bf16.mxu0 0
        %1050 = vmatpush1.bf16.msra.mxu0 %v1023
        %1051 = vmatprep.subr.bf16.mxu0 0
        %1052 = vmatpush1.bf16.msra.mxu0 %v1024
        %1053 = vmatprep.subr.bf16.mxu0 0
        %1054 = vmatpush1.bf16.msra.mxu0 %v1025
        %1055 = vmatprep.subr.bf16.mxu0 0
        %1056 = vmatpush1.bf16.msra.mxu0 %v1026
        %1057 = vmatprep.subr.bf16.mxu0 0
        %1058 = vmatpush1.bf16.msra.mxu0 %v1027
        %1059 = vmatprep.subr.bf16.mxu0 0
        %1060 = vmatpush1.bf16.msra.mxu0 %v1028
        %1061 = vmatprep.mubr.bf16.mxu0 %v308
        %1062 = vmatmul.mubr.bf16.gmra.mrb[0].mxu0 %v307
        %v1063 = vpop.f32.mrb[0].mxu0
        %v1064 = vadd.f32 %v770, %v1063
        %v1065 = vpop.f32.mrb[0].mxu0
        %v1066 = vpop.f32.mrb[0].mxu0
        %v1067 = vpop.f32.mrb[0].mxu0
        %1068 = vdwg.mxu0
        %s1069 = scalar_lea.vmem %s242, 4 [#allocation2]
        %1070 = vst [vmem:[%s1069] sm:$0xf] %v1064
        %s1071 = sand.u32 %s153, 1
        %s1072 = scalar_lea.sflag [#allocation3], %s1071
        %s1073 = sand.u32 %s153, 1
        %s1074 = smul.addr %s1073, 8
        %s1075 = scalar_lea.vmem [#allocation2], %s1074
        // Predicated region
        $region41: #{tpu_custom_call.1} parent=39 // pred_check
          %p1076 = pneg %p163
        $region42: #{tpu_custom_call.1} parent=39 // pred_check_branch
          %1078 = sbr.rel (%p1076) target = $region44
        $region43: #{tpu_custom_call.1} parent=39 // pred_region
          %s1079 = smul.u32 2, %s24
          %s1081 = ssub.s32 128, 128
          %1082 = vsyncadd %s1072, %s1081
          %s1083 = smul.addr %s23, 2
          %s1084 = sadd.s32 %s1079, %s1083
          %s1085 = smul.addr %s1084, 64
          %s1086 = scalar_lea.hbm %s5, %s1085
          %s1088 = sshll.u32 %s1075, 4
          %s1089 = int_to_ptr.vmem [resolvable:$true] %s1088
          %1091 = dma.vmem_to_hbm [thread:$0]  %s1089, 128, %s1086, %s1072
        $region44: #{tpu_custom_call.1} parent=39 // pred_fallthru
          _
      $region40: #{tpu_custom_call.1} parent=5 // pred_fallthru
        _
      %p1092 = scmp.le.s32.totalorder 2, %s14
      // Predicated region
      $region45: #{tpu_custom_call.1} parent=5 // pred_check
        %p1093 = pneg %p1092
      $region46: #{tpu_custom_call.1} parent=5 // pred_check_branch
        %1095 = sbr.rel (%p1093) target = $region48
      $region47: #{tpu_custom_call.1} parent=5 // pred_region
        %s1096 = ssub.s32 %s14, 2
        // Predicated region
        $region49: #{tpu_custom_call.1} parent=47 // pred_check
          %p1097 = pneg %p169
        $region50: #{tpu_custom_call.1} parent=47 // pred_check_branch
          %1099 = sbr.rel (%p1097) target = $region52
        $region51: #{tpu_custom_call.1} parent=47 // pred_region
          %s1100 = sand.u32 %s154, 1
          %s1101 = scalar_lea.sflag [#allocation3], %s1100
          %s1102 = sand.u32 %s154, 1
          %s1103 = smul.addr %s1102, 8
          %s1104 = scalar_lea.vmem [#allocation2], %s1103
          %1105 = dma.done %s1101, 128
        $region52: #{tpu_custom_call.1} parent=47 // pred_fallthru
          _
      $region48: #{tpu_custom_call.1} parent=5 // pred_fallthru
        _
    $region6: #{tpu_custom_call.1} parent=1 // loop_footer
      %s18 = sadd.s32 1, %s14
    $region7: #{tpu_custom_call.1} parent=1 // loop_footer_branch
      %13 = sbr.rel target = $region3
    $region8: #{tpu_custom_call.1} parent=1 // loop_exit
      _
    %1106 = vsyncpa [#allocation3], 1
    %s1107 = scalar_lea.sflag [#allocation3], 1
    %1108 = vsyncpa %s1107, 1

</llo_original>
